<compile_context>
chip_gen: v6e
topology: v6e:2x2x1
jax: 0.10.0
libtpu: 0.0.40
codegen_flags: <defaults>
</compile_context>

<pallas_src>
import functools

import jax
import jax.numpy as jnp
from jax import lax
from jax.experimental import pallas as pl
from jax.experimental.pallas import tpu as pltpu


# ----------------------------------------------------------------------------
# Pallas kernels
# ----------------------------------------------------------------------------
def _ln_body(x_ref, w_ref, b_ref, o_ref, *, eps, f32_tail):
    # x_ref: (b_tile, C, hw_tile); w_ref/b_ref: (C, 1).
    x = x_ref[...]
    xf = x.astype(jnp.float32)
    mu = jnp.mean(xf, axis=1, keepdims=True)                       # (bt,1,hw)
    var = jnp.mean(jnp.square(xf - mu), axis=1, keepdims=True)     # biased var
    inv = lax.rsqrt(var + eps)

    # Elementwise tail: f32 always on v5e / f32 inputs; input dtype (bf16) on
    # v6e/v7x to cut VALU + cast work while stats remain f32.
    td = jnp.float32 if f32_tail else o_ref.dtype
    xt = xf if f32_tail else x.astype(td)
    w = w_ref[...].astype(td)[None]                                # (1, C, 1)
    inv_t = inv.astype(td)
    if b_ref is None:
        out = xt * inv_t * w                                       # BiasFree
    else:
        b = b_ref[...].astype(td)[None]
        out = (xt - mu.astype(td)) * inv_t * w + b                 # WithBias
    o_ref[...] = out.astype(o_ref.dtype)


def _ln_withbias_kernel(x_ref, w_ref, b_ref, o_ref, *, eps, f32_tail):
    _ln_body(x_ref, w_ref, b_ref, o_ref, eps=eps, f32_tail=f32_tail)


def _ln_biasfree_kernel(x_ref, w_ref, o_ref, *, eps, f32_tail):
    _ln_body(x_ref, w_ref, None, o_ref, eps=eps, f32_tail=f32_tail)


# ----------------------------------------------------------------------------
# Generation-aware configuration
# ----------------------------------------------------------------------------
def _chip_config():
    kind = ""
    try:
        kind = jax.devices()[0].device_kind.lower()
    except Exception:
        pass
    if "v5" in kind:
        # ~820 GB/s HBM, no bf16 VPU; default scoped VMEM 16 MiB -> raise.
        return {"vmem_limit": 32 << 20, "tile_budget": 2 << 20,
                "bf16_tail": False}
    if "v6" in kind:
        # 128 MiB VMEM, 1.3-1.4 TB/s HBM: large tiles, plenty of headroom.
        return {"vmem_limit": 64 << 20, "tile_budget": 4 << 20,
                "bf16_tail": True}
    if "v7" in kind:
        # 64 MiB VMEM per TC: tighter ceiling, keep ~4x block + params << 40M.
        return {"vmem_limit": 40 << 20, "tile_budget": 4 << 20,
                "bf16_tail": True}
    # Unknown generation: conservative (v7x-like) settings.
    return {"vmem_limit": 40 << 20, "tile_budget": 4 << 20, "bf16_tail": True}


def _round_up(n, m):
    return (n + m - 1) // m * m


def _pick_tiles(B, C, HW, itemsize, budget):
    """Pick (b_tile, hw_tile) with sublane-padding-aware byte accounting."""
    pack = max(1, 32 // itemsize)          # 8 sublanes f32, 16 bf16, 32 int8
    lane_col_bytes = _round_up(C, pack) * itemsize

    if HW <= 128:
        hw_tile = HW                       # full extent (always legal)
    else:
        max_lanes = max(128, (budget // lane_col_bytes) // 128 * 128)
        hw_tile = min((HW // 128) * 128, max_lanes)

    b_tile = max(1, min(B, budget // (lane_col_bytes * hw_tile)))

    # Keep at least ~8 blocks so megacore / both v7x TCs have work on small
    # inputs; shrink b_tile first (free), then hw_tile (keep 128-multiple).
    def nblocks(bt, ht):
        return pl.cdiv(B, bt) * pl.cdiv(HW, ht)

    min_blocks = 8
    while nblocks(b_tile, hw_tile) < min_blocks and b_tile > 1:
        b_tile //= 2
    while nblocks(b_tile, hw_tile) < min_blocks and hw_tile > 128:
        hw_tile = max(128, (hw_tile // 2) // 128 * 128)
    return b_tile, hw_tile


# ----------------------------------------------------------------------------
# Public wrapper: matches LayerNorm(dim, LayerNorm_type).forward semantics.
# ----------------------------------------------------------------------------
def layer_norm(x, weight, bias=None, *, layer_norm_type="WithBias", eps=1e-5):
    """x: (B, C, H, W) -> (B, C, H, W); normalization over C per pixel."""
    B, C, H, W = x.shape
    HW = H * W
    bias_free = (layer_norm_type == "BiasFree")
    if not bias_free and bias is None:
        raise ValueError("layer_norm_type='WithBias' requires a bias array")

    cfg = _chip_config()
    itemsize = jnp.dtype(x.dtype).itemsize
    b_tile, hw_tile = _pick_tiles(B, C, HW, itemsize, cfg["tile_budget"])
    f32_tail = not (cfg["bf16_tail"] and x.dtype == jnp.bfloat16)

    x3 = x.reshape(B, C, HW)                    # free reshape (contiguous)
    w2 = weight.reshape(C, 1)

    grid = (pl.cdiv(B, b_tile), pl.cdiv(HW, hw_tile))
    x_spec = pl.BlockSpec((b_tile, C, hw_tile), lambda i, j: (i, 0, j))
    p_spec = pl.BlockSpec((C, 1), lambda i, j: (0, 0))

    compiler_params = pltpu.CompilerParams(
        dimension_semantics=("parallel", "parallel"),
        vmem_limit_bytes=cfg["vmem_limit"],
    )
    out_shape = jax.ShapeDtypeStruct((B, C, HW), x.dtype)

    if bias_free:
        y3 = pl.pallas_call(
            functools.partial(_ln_biasfree_kernel, eps=eps, f32_tail=f32_tail),
            out_shape=out_shape,
            grid=grid,
            in_specs=[x_spec, p_spec],
            out_specs=x_spec,
            compiler_params=compiler_params,
        )(x3, w2)
    else:
        b2 = bias.reshape(C, 1)
        y3 = pl.pallas_call(
            functools.partial(_ln_withbias_kernel, eps=eps, f32_tail=f32_tail),
            out_shape=out_shape,
            grid=grid,
            in_specs=[x_spec, p_spec, p_spec],
            out_specs=x_spec,
            compiler_params=compiler_params,
        )(x3, w2, b2)
    return y3.reshape(B, C, H, W)


# ----------------------------------------------------------------------------
# Pure-JAX reference (mirrors the PyTorch to_3d / WithBias / BiasFree path)
# ----------------------------------------------------------------------------
def _layer_norm_ref(x, weight, bias, bias_free):
    B, C, H, W = x.shape
    xt = x.reshape(B, C, H * W).transpose(0, 2, 1).astype(jnp.float32)
    mu = jnp.mean(xt, axis=-1, keepdims=True)
    var = jnp.mean((xt - mu) ** 2, axis=-1, keepdims=True)   # unbiased=False
    w = weight.astype(jnp.float32)
    if bias_free:
        y = xt / jnp.sqrt(var + 1e-5) * w
    else:
        y = (xt - mu) / jnp.sqrt(var + 1e-5) * w + bias.astype(jnp.float32)
    return y.transpose(0, 2, 1).reshape(B, C, H, W).astype(x.dtype)


if __name__ == "__main__":
    key = jax.random.PRNGKey(0)

    # --- main case: B=2, C=4, H=W=16, f32, both norm types -----------------
    B, C, H, W = 2, 4, 16, 16
    kx, kw, kb = jax.random.split(key, 3)
    x = jax.random.normal(kx, (B, C, H, W), jnp.float32)
    weight = 1.0 + 0.1 * jax.random.normal(kw, (C,), jnp.float32)
    bias = 0.1 * jax.random.normal(kb, (C,), jnp.float32)

    ln_wb = jax.jit(functools.partial(layer_norm, layer_norm_type="WithBias"))
    ln_bf = jax.jit(functools.partial(layer_norm, layer_norm_type="BiasFree"))

    y_wb = ln_wb(x, weight, bias)
    y_bf = ln_bf(x, weight, bias)
    jax.block_until_ready((y_wb, y_bf))

    ref_wb = _layer_norm_ref(x, weight, bias, bias_free=False)
    ref_bf = _layer_norm_ref(x, weight, bias, bias_free=True)
    assert y_wb.shape == x.shape and y_bf.shape == x.shape
    assert bool(jnp.all(jnp.isfinite(y_wb)))
    assert jnp.allclose(y_wb, ref_wb, atol=1e-5, rtol=1e-5)
    assert jnp.allclose(y_bf, ref_bf, atol=1e-5, rtol=1e-5)

    # --- ragged HW (HW=130, not a 128-multiple) exercises the cdiv tail ----
    kx2 = jax.random.fold_in(key, 1)
    x2 = jax.random.normal(kx2, (2, 4, 10, 13), jnp.float32)
    y2 = ln_wb(x2, weight, bias)
    jax.block_until_ready(y2)
    ref2 = _layer_norm_ref(x2, weight, bias, bias_free=False)
    assert jnp.allclose(y2, ref2, atol=1e-5, rtol=1e-5)

    # --- bf16 input (bf16 elementwise tail on v6e/v7x, f32 on v5e) ---------
    kx3, kw3, kb3 = jax.random.split(jax.random.fold_in(key, 2), 3)
    xb = jax.random.normal(kx3, (2, 16, 16, 16), jnp.bfloat16)
    wb3 = (1.0 + 0.1 * jax.random.normal(kw3, (16,), jnp.float32)).astype(
        jnp.bfloat16)
    bb3 = (0.1 * jax.random.normal(kb3, (16,), jnp.float32)).astype(
        jnp.bfloat16)
    y3 = ln_wb(xb, wb3, bb3)
    jax.block_until_ready(y3)
    ref3 = _layer_norm_ref(xb, wb3, bb3, bias_free=False)
    assert bool(jnp.all(jnp.isfinite(y3.astype(jnp.float32))))
    assert jnp.allclose(y3.astype(jnp.float32), ref3.astype(jnp.float32),
                        atol=1e-1, rtol=1e-1)

    print("KERNEL_OK")
</pallas_src>

<mosaic_0001>
module attributes {stable_mosaic.version = 11 : i64} {
  func.func @_ln_withbias_kernel(%arg0: i32, %arg1: i32, %arg2: memref<1x4x128xf32, #tpu.memory_space<vmem>>, %arg3: memref<4x1xf32, #tpu.memory_space<vmem>>, %arg4: memref<4x1xf32, #tpu.memory_space<vmem>>, %arg5: memref<1x4x128xf32, #tpu.memory_space<vmem>>) attributes {dimension_semantics = [#tpu.dimension_semantics<parallel>, #tpu.dimension_semantics<parallel>], iteration_bounds = array<i64: 2, 2>, scalar_prefetch = 0 : i64, scratch_operands = 0 : i64, tpu.core_type = #tpu.core_type<tc>, window_params = [{transform_indices = @transform_0, window_bounds = array<i64: 1, 4, 128>}, {pipeline_mode = #tpu.pipeline_mode<synchronous>, transform_indices = @transform_1, window_bounds = array<i64: 4, 1>}, {pipeline_mode = #tpu.pipeline_mode<synchronous>, transform_indices = @transform_2, window_bounds = array<i64: 4, 1>}, {transform_indices = @transform_3, window_bounds = array<i64: 1, 4, 128>}]} {
    %c0 = arith.constant 0 : index
    %c0_0 = arith.constant 0 : index
    %c0_1 = arith.constant 0 : index
    %0 = vector.load %arg2[%c0, %c0_0, %c0_1] : memref<1x4x128xf32, #tpu.memory_space<vmem>>, vector<1x4x128xf32>
    %cst = arith.constant dense<0.000000e+00> : vector<1x128xf32>
    %1 = vector.multi_reduction <add>, %0, %cst [1] : vector<1x4x128xf32> to vector<1x128xf32>
    %2 = vector.shape_cast %1 : vector<1x128xf32> to vector<1x1x128xf32>
    %cst_2 = arith.constant 4.000000e+00 : f32
    %3 = vector.broadcast %cst_2 : f32 to vector<1x1x128xf32>
    %4 = arith.divf %2, %3 : vector<1x1x128xf32>
    %5 = vector.broadcast %4 : vector<1x1x128xf32> to vector<1x4x128xf32>
    %6 = arith.subf %0, %5 : vector<1x4x128xf32>
    %7 = arith.mulf %6, %6 : vector<1x4x128xf32>
    %cst_3 = arith.constant dense<0.000000e+00> : vector<1x128xf32>
    %8 = vector.multi_reduction <add>, %7, %cst_3 [1] : vector<1x4x128xf32> to vector<1x128xf32>
    %9 = vector.shape_cast %8 : vector<1x128xf32> to vector<1x1x128xf32>
    %cst_4 = arith.constant 4.000000e+00 : f32
    %10 = vector.broadcast %cst_4 : f32 to vector<1x1x128xf32>
    %11 = arith.divf %9, %10 : vector<1x1x128xf32>
    %cst_5 = arith.constant 9.99999974E-6 : f32
    %12 = vector.broadcast %cst_5 : f32 to vector<1x1x128xf32>
    %13 = arith.addf %11, %12 : vector<1x1x128xf32>
    %14 = math.rsqrt %13 : vector<1x1x128xf32>
    %c0_6 = arith.constant 0 : index
    %c0_7 = arith.constant 0 : index
    %15 = vector.load %arg3[%c0_6, %c0_7] : memref<4x1xf32, #tpu.memory_space<vmem>>, vector<4x1xf32>
    %16 = vector.shape_cast %15 : vector<4x1xf32> to vector<1x4x1xf32>
    %c0_8 = arith.constant 0 : index
    %c0_9 = arith.constant 0 : index
    %17 = vector.load %arg4[%c0_8, %c0_9] : memref<4x1xf32, #tpu.memory_space<vmem>>, vector<4x1xf32>
    %18 = vector.shape_cast %17 : vector<4x1xf32> to vector<1x4x1xf32>
    %19 = vector.broadcast %4 : vector<1x1x128xf32> to vector<1x4x128xf32>
    %20 = arith.subf %0, %19 : vector<1x4x128xf32>
    %21 = vector.broadcast %14 : vector<1x1x128xf32> to vector<1x4x128xf32>
    %22 = arith.mulf %20, %21 : vector<1x4x128xf32>
    %23 = vector.broadcast %16 : vector<1x4x1xf32> to vector<1x4x128xf32>
    %24 = arith.mulf %22, %23 : vector<1x4x128xf32>
    %25 = vector.broadcast %18 : vector<1x4x1xf32> to vector<1x4x128xf32>
    %26 = arith.addf %24, %25 : vector<1x4x128xf32>
    %c0_10 = arith.constant 0 : index
    %c0_11 = arith.constant 0 : index
    %c0_12 = arith.constant 0 : index
    %27 = vector.load %arg5[%c0_10, %c0_11, %c0_12] : memref<1x4x128xf32, #tpu.memory_space<vmem>>, vector<1x4x128xf32>
    tpu.vector_store %arg5[%c0_10, %c0_11, %c0_12], %26 {strides = array<i32>} : memref<1x4x128xf32, #tpu.memory_space<vmem>>, vector<1x4x128xf32>,
    return
  }
  func.func @transform_0(%arg0: i32, %arg1: i32) -> (i32, i32, i32) {
    %c0_i32 = arith.constant 0 : i32
    %c0_i32_0 = arith.constant 0 : i32
    return %arg0, %c0_i32, %arg1 : i32, i32, i32
  }
  func.func @transform_1(%arg0: i32, %arg1: i32) -> (i32, i32) {
    %c0_i32 = arith.constant 0 : i32
    %c0_i32_0 = arith.constant 0 : i32
    %c0_i32_1 = arith.constant 0 : i32
    return %c0_i32, %c0_i32_0 : i32, i32
  }
  func.func @transform_2(%arg0: i32, %arg1: i32) -> (i32, i32) {
    %c0_i32 = arith.constant 0 : i32
    %c0_i32_0 = arith.constant 0 : i32
    %c0_i32_1 = arith.constant 0 : i32
    return %c0_i32, %c0_i32_0 : i32, i32
  }
  func.func @transform_3(%arg0: i32, %arg1: i32) -> (i32, i32, i32) {
    %c0_i32 = arith.constant 0 : i32
    %c0_i32_0 = arith.constant 0 : i32
    return %arg0, %c0_i32, %arg1 : i32, i32, i32
  }
}

</mosaic_0001>

<llo_original>
// kernel: layer_norm.1
$region0: #{layer_norm.1}
  #allocation0 [shape = 'u32[]', space=smem, size = 0x4, offset = 0x4, fixed_abs, tag = 'smem constant byte address 0x4 - core index']
  #allocation1 [shape = 'u32[144,128]{1,0:T(1,128)}', space=vmem, size = 0x12000, scoped, tag = 'internal scratch']
  %s0 = inlined_call_operand.vmem [shape: f32[2,4,256], index: 0, kind: input, shape index: {}]
  %s1 = inlined_call_operand.vmem [shape: f32[4,1], index: 1, kind: input, shape index: {}]
  %s2 = inlined_call_operand.vmem [shape: f32[4,1], index: 2, kind: input, shape index: {}]
  %s3 = inlined_call_operand.vmem [shape: f32[2,4,256], index: 3, kind: output, shape index: {}]
  %s4 = sld [smem:[#allocation0]]
  $region45: #{layer_norm.1} parent=0
    _
  %s6 = ssub.s32 1, %s4
  %s7 = scalar_select 0, %s6, %s4
  loop: start=0, step=1, limit=6
  $region2: #{layer_norm.1} parent=0 // loop_pre_header
    _
  $region3: #{layer_norm.1} parent=0 // loop_header
    %s9 = sphi 0, %s13
    %p10 = scmp.ge.s32.totalorder %s9, 6
    %s16 = sphi 0, %s28
    %s17 = sphi 0, %s24
    %s18 = sphi 0, %s16
    %s19 = sphi 0, %s17
    %s20 = sphi 0, %s18
    %s21 = sphi 0, %s19
    %s33 = sphi 0, %s35
    %s36 = sphi 0, %s33
    %s37 = sphi 0, %s36
    %s53 = sphi 0, %s37
    %s57 = sphi 0, %s57
    %s59 = sphi 0, %s57
    %s60 = sphi 0, %s59
    %s74 = sphi 0, %s60
    %s78 = sphi 0, %s78
    %s80 = sphi 0, %s78
    %s81 = sphi 0, %s80
    %s95 = sphi 0, %s81
    %s103 = sphi 0, %s105
    %s106 = sphi 0, %s103
    %s107 = sphi 0, %s106
    %s123 = sphi 0, %s107
  $region4: #{layer_norm.1} parent=0 // loop_header_branch
    %12 = sbr.rel (%p10) target = $region8
  $region5: #{layer_norm.1} parent=0 // loop_body
    %s14 = ssub.s32 %s9, 1
    %s15 = ssub.s32 %s9, 2
    %s22 = sadd.s32 1, %s17
    %p23 = scmp.ge.s32.totalorder %s22, 2
    %s24 = scalar_select %p23, 0, %s22
    %s25 = sadd.s32 1, %s16
    %s26 = scalar_select %p23, %s25, %s16
    %p27 = scmp.ge.s32.totalorder %s26, 2
    %s28 = scalar_select %p27, 0, %s26
    %s29 = ssub.s32 %s16, %s28
    %s30 = ssub.s32 %s17, %s24
    %s31 = sor.u32 %s29, %s30
    %p32 = scmp.eq.s32.totalorder %s31, 0
    %s34 = sadd.s32 %s33, 1
    %s35 = scalar_select %p32, %s33, %s34
    %p38 = pneg %p32
    %p39 = scmp.eq.s32.totalorder %s9, 3
    %p40 = por %p38, %p39
    %p41 = scmp.ne.s32.totalorder %s33, %s36
    %p42 = scmp.eq.s32.totalorder %s9, 0
    %p43 = por %p41, %p42
    %p44 = scmp.ne.s32.totalorder %s33, %s36
    %p45 = scmp.eq.s32.totalorder %s14, 3
    %p46 = por %p44, %p45
    %p47 = scmp.ne.s32.totalorder %s36, %s37
    %p48 = scmp.eq.s32.totalorder %s14, 0
    %p49 = por %p47, %p48
    %p50 = scmp.ne.s32.totalorder %s36, %s37
    %p51 = scmp.eq.s32.totalorder %s15, 3
    %p52 = por %p50, %p51
    %p54 = scmp.ne.s32.totalorder %s37, %s53
    %p55 = scmp.eq.s32.totalorder %s15, 0
    %p56 = por %p54, %p55
    %s58 = sadd.s32 %s57, 1
    %p61 = scmp.eq.s32.totalorder %s9, 3
    %p62 = scmp.ne.s32.totalorder %s57, %s59
    %p63 = scmp.eq.s32.totalorder %s9, 0
    %p64 = por %p62, %p63
    %p65 = scmp.ne.s32.totalorder %s57, %s59
    %p66 = scmp.eq.s32.totalorder %s14, 3
    %p67 = por %p65, %p66
    %p68 = scmp.ne.s32.totalorder %s59, %s60
    %p69 = scmp.eq.s32.totalorder %s14, 0
    %p70 = por %p68, %p69
    %p71 = scmp.ne.s32.totalorder %s59, %s60
    %p72 = scmp.eq.s32.totalorder %s15, 3
    %p73 = por %p71, %p72
    %p75 = scmp.ne.s32.totalorder %s60, %s74
    %p76 = scmp.eq.s32.totalorder %s15, 0
    %p77 = por %p75, %p76
    %s79 = sadd.s32 %s78, 1
    %p82 = scmp.eq.s32.totalorder %s9, 3
    %p83 = scmp.ne.s32.totalorder %s78, %s80
    %p84 = scmp.eq.s32.totalorder %s9, 0
    %p85 = por %p83, %p84
    %p86 = scmp.ne.s32.totalorder %s78, %s80
    %p87 = scmp.eq.s32.totalorder %s14, 3
    %p88 = por %p86, %p87
    %p89 = scmp.ne.s32.totalorder %s80, %s81
    %p90 = scmp.eq.s32.totalorder %s14, 0
    %p91 = por %p89, %p90
    %p92 = scmp.ne.s32.totalorder %s80, %s81
    %p93 = scmp.eq.s32.totalorder %s15, 3
    %p94 = por %p92, %p93
    %p96 = scmp.ne.s32.totalorder %s81, %s95
    %p97 = scmp.eq.s32.totalorder %s15, 0
    %p98 = por %p96, %p97
    %s99 = ssub.s32 %s16, %s28
    %s100 = ssub.s32 %s17, %s24
    %s101 = sor.u32 %s99, %s100
    %p102 = scmp.eq.s32.totalorder %s101, 0
    %s104 = sadd.s32 %s103, 1
    %s105 = scalar_select %p102, %s103, %s104
    %p108 = pneg %p102
    %p109 = scmp.eq.s32.totalorder %s9, 3
    %p110 = por %p108, %p109
    %p111 = scmp.ne.s32.totalorder %s103, %s106
    %p112 = scmp.eq.s32.totalorder %s9, 0
    %p113 = por %p111, %p112
    %p114 = scmp.ne.s32.totalorder %s103, %s106
    %p115 = scmp.eq.s32.totalorder %s14, 3
    %p116 = por %p114, %p115
    %p117 = scmp.ne.s32.totalorder %s106, %s107
    %p118 = scmp.eq.s32.totalorder %s14, 0
    %p119 = por %p117, %p118
    %p120 = scmp.ne.s32.totalorder %s106, %s107
    %p121 = scmp.eq.s32.totalorder %s15, 3
    %p122 = por %p120, %p121
    %p124 = scmp.ne.s32.totalorder %s107, %s123
    %p125 = scmp.eq.s32.totalorder %s15, 0
    %p126 = por %p124, %p125
    %p127 = scmp.le.s32.totalorder 1, %s9
    %p128 = scmp.lt.s32.totalorder %s9, 5
    %p129 = pnand %p127, %p128
    %p130 = pneg %p129
    // Predicated region
    $region9: #{layer_norm.1} parent=5 // pred_check
      _
    $region10: #{layer_norm.1} parent=5 // pred_check_branch
      %132 = sbr.rel (%p129) target = $region12
    $region11: #{layer_norm.1} parent=5 // pred_region
      %s133 = ssub.s32 %s9, 1
      // Predicated region
      $region13: #{layer_norm.1} parent=11 // pred_check
        %p134 = pneg %p70
      $region14: #{layer_norm.1} parent=11 // pred_check_branch
        %136 = sbr.rel (%p134) target = $region16
      $region15: #{layer_norm.1} parent=11 // pred_region
        _
      $region16: #{layer_norm.1} parent=11 // pred_fallthru
        _
      // Predicated region
      $region17: #{layer_norm.1} parent=11 // pred_check
        %p137 = pneg %p91
      $region18: #{layer_norm.1} parent=11 // pred_check_branch
        %139 = sbr.rel (%p137) target = $region20
      $region19: #{layer_norm.1} parent=11 // pred_region
        _
      $region20: #{layer_norm.1} parent=11 // pred_fallthru
        _
    $region12: #{layer_norm.1} parent=5 // pred_fallthru
      _
    %p140 = scmp.lt.s32.totalorder %s9, 4
    // Predicated region
    $region21: #{layer_norm.1} parent=5 // pred_check
      %p141 = pneg %p140
    $region22: #{layer_norm.1} parent=5 // pred_check_branch
      %143 = sbr.rel (%p141) target = $region24
    $region23: #{layer_norm.1} parent=5 // pred_region
      // Predicated region
      $region25: #{layer_norm.1} parent=23 // pred_check
        %p144 = pneg %p43
      $region26: #{layer_norm.1} parent=23 // pred_check_branch
        %146 = sbr.rel (%p144) target = $region28
      $region27: #{layer_norm.1} parent=23 // pred_region
        %p147 = scmp.lt.s32.totalorder %s16, 1
        %s148 = scalar_select %p147, %s16, 1
        %p149 = scmp.lt.s32.totalorder %s17, 1
        %s150 = scalar_select %p149, %s17, 1
        %s151 = smul.addr %s148, 2
        %s152 = sadd.s32 %s150, %s151
        %s153 = smul.addr %s152, 4
        %s154 = scalar_lea.vmem %s0, %s153
      $region28: #{layer_norm.1} parent=23 // pred_fallthru
        _
    $region24: #{layer_norm.1} parent=5 // pred_fallthru
      _
    %p155 = scmp.le.s32.totalorder 1, %s9
    %p156 = scmp.lt.s32.totalorder %s9, 5
    %p157 = pnand %p155, %p156
    %p158 = pneg %p157
    // Predicated region
    $region29: #{layer_norm.1} parent=5 // pred_check
      _
    $region30: #{layer_norm.1} parent=5 // pred_check_branch
      %160 = sbr.rel (%p157) target = $region32
    $region31: #{layer_norm.1} parent=5 // pred_region
      %s161 = ssub.s32 %s9, 1
      %p162 = scmp.lt.s32.totalorder %s18, 1
      %s163 = scalar_select %p162, %s18, 1
      %p164 = scmp.lt.s32.totalorder %s19, 1
      %s165 = scalar_select %p164, %s19, 1
      %s166 = smul.addr %s163, 2
      %s167 = sadd.s32 %s165, %s166
      %s168 = smul.addr %s167, 4
      %s169 = scalar_lea.vmem %s0, %s168
      %p170 = pneg %p49
      %p171 = pneg %p46
      %p172 = pneg %p70
      %p173 = pneg %p67
      %p174 = pneg %p91
      %p175 = pneg %p88
      %p176 = pneg %p119
      %p177 = pneg %p116
      %p178 = scmp.lt.s32.totalorder %s18, 1
      %s179 = scalar_select %p178, %s18, 1
      %p180 = scmp.lt.s32.totalorder %s19, 1
      %s181 = scalar_select %p180, %s19, 1
      %s182 = smul.addr %s179, 2
      %s183 = sadd.s32 %s181, %s182
      %s184 = smul.addr %s183, 4
      %s185 = scalar_lea.vmem %s3, %s184
      %p186 = scmp.lt.s32.totalorder %s18, 1
      %s187 = scalar_select %p186, %s18, 1
      %p188 = scmp.lt.s32.totalorder %s19, 1
      %s189 = scalar_select %p188, %s19, 1
      %s190 = smul.addr %s187, 2
      %s191 = sadd.s32 %s189, %s190
      %s192 = smul.addr %s191, 4
      %s193 = scalar_lea.vmem %s0, %s192
      %p194 = scmp.lt.s32.totalorder %s18, 1
      %s195 = scalar_select %p194, %s18, 1
      %p196 = scmp.lt.s32.totalorder %s19, 1
      %s197 = scalar_select %p196, %s19, 1
      %s198 = smul.addr %s195, 2
      %s199 = sadd.s32 %s197, %s198
      %s200 = smul.addr %s199, 4
      %s201 = scalar_lea.vmem %s3, %s200
      %v202 = vld [vmem:[%s193] sm:$0xf]
      %vm203 = vcmask 1043456
      %v204 = vsel %vm203, %v202, 0.0
      %v205 = vrot.slane %v204, 4
      %v206 = vadd.f32 %v204, %v205
      %v207 = vrot.slane %v206, 2
      %v208 = vadd.f32 %v206, %v207
      %v209 = vrot.slane %v208, 1
      %v210 = vadd.f32 %v208, %v209
      %v211 = vrcp.pop 4.0
      %v212 = vmul.f32 %v210, %v211
      %v213 = vsub.f32 %v202, %v212
      %v214 = vmul.f32 %v213, %v213
      %v215 = vsel %vm203, %v214, 0.0
      %v216 = vrot.slane %v215, 4
      %v217 = vadd.f32 %v215, %v216
      %v218 = vrot.slane %v217, 2
      %v219 = vadd.f32 %v217, %v218
      %v220 = vrot.slane %v219, 1
      %v221 = vadd.f32 %v219, %v220
      %v222 = vmul.f32 %v221, %v211
      %v223 = vadd.f32 %v222, 1e-05
      %v224 = vrsqrt.pop %v223
      %v225 = vld [vmem:[%s1] sm:$0xf]
      %v226 = vld [vmem:[%s2] sm:$0xf]
      %v227 = vmul.f32 %v213, %v224
      %229 = vset.pattern.permute.xlu0 0
      %230 = vperm.xlu0 %229, %v225
      %v231 = vpop.permute.xlu0 %230
      %v233 = vmul.f32 %v227, %v231
      %235 = vset.pattern.permute.xlu0 0
      %236 = vperm.xlu0 %235, %v226
      %v237 = vpop.permute.xlu0 %236
      %v239 = vadd.f32 %v233, %v237
      %240 = vst [vmem:[%s201] sm:$0xf] %v239
      %p241 = scmp.lt.s32.totalorder %s18, 1
      %s242 = scalar_select %p241, %s18, 1
      %p243 = scmp.lt.s32.totalorder %s19, 1
      %s244 = scalar_select %p243, %s19, 1
      %s245 = smul.addr %s242, 2
      %s246 = sadd.s32 %s244, %s245
      %s247 = smul.addr %s246, 4
      %s248 = scalar_lea.vmem %s3, %s247
      // Predicated region
      $region33: #{layer_norm.1} parent=31 // pred_check
        %p249 = pneg %p116
      $region34: #{layer_norm.1} parent=31 // pred_check_branch
        %251 = sbr.rel (%p249) target = $region36
      $region35: #{layer_norm.1} parent=31 // pred_region
        _
      $region36: #{layer_norm.1} parent=31 // pred_fallthru
        _
    $region32: #{layer_norm.1} parent=5 // pred_fallthru
      _
    %p252 = scmp.le.s32.totalorder 2, %s9
    // Predicated region
    $region37: #{layer_norm.1} parent=5 // pred_check
      %p253 = pneg %p252
    $region38: #{layer_norm.1} parent=5 // pred_check_branch
      %255 = sbr.rel (%p253) target = $region40
    $region39: #{layer_norm.1} parent=5 // pred_region
      %s256 = ssub.s32 %s9, 2
      // Predicated region
      $region41: #{layer_norm.1} parent=39 // pred_check
        %p257 = pneg %p122
      $region42: #{layer_norm.1} parent=39 // pred_check_branch
        %259 = sbr.rel (%p257) target = $region44
      $region43: #{layer_norm.1} parent=39 // pred_region
        %p260 = scmp.lt.s32.totalorder %s20, 1
        %s261 = scalar_select %p260, %s20, 1
        %p262 = scmp.lt.s32.totalorder %s21, 1
        %s263 = scalar_select %p262, %s21, 1
        %s264 = smul.addr %s261, 2
        %s265 = sadd.s32 %s263, %s264
        %s266 = smul.addr %s265, 4
        %s267 = scalar_lea.vmem %s3, %s266
      $region44: #{layer_norm.1} parent=39 // pred_fallthru
        _
    $region40: #{layer_norm.1} parent=5 // pred_fallthru
      _
  $region6: #{layer_norm.1} parent=0 // loop_footer
    %s13 = sadd.s32 1, %s9
  $region7: #{layer_norm.1} parent=0 // loop_footer_branch
    %8 = sbr.rel target = $region3
  $region8: #{layer_norm.1} parent=0 // loop_exit
    _

</llo_original>
